<compile_context>
chip_gen: v5e
topology: v5e:2x2
jax: 0.10.0
libtpu: 0.0.40
codegen_flags: <defaults>
</compile_context>

<pallas_src>
import functools
import math

import jax
import jax.numpy as jnp
from jax import lax
from jax.experimental import pallas as pl
from jax.experimental.pallas import tpu as pltpu


def _round_up(x, m):
    return (x + m - 1) // m * m


def _embed_kernel(ids_ref,    # SMEM (num_tiles*T,) int32 (scalar prefetch: word ids)
                  pids_ref,   # VMEM (T, 1) int32         (this tile's position ids)
                  pos_ref,    # VMEM (P, H)               (whole position table, resident)
                  w_hbm,      # HBM  (V, H)               (word table, row-gathered)
                  o_ref,      # VMEM (T, H)               (output block)
                  sem,        # DMA semaphore, shape (1,)
                  *, tile, unroll):
    t = pl.program_id(0)
    base = pl.multiple_of(t * tile, tile)

    # 1) Issue `tile` word-row gather DMAs straight into the output block.
    #    Chunk-unrolled so the LLO scheduler co-issues address arithmetic
    #    (scalar slots) with descriptor pushes (misc slot).
    n_chunks = tile // unroll

    @pl.loop(0, n_chunks)
    def _issue(c):
        off = pl.multiple_of(c * unroll, unroll)
        for u in range(unroll):                      # python-unrolled chunk
            i = off + u
            wid = ids_ref[base + i]
            pltpu.make_async_copy(w_hbm.at[pl.ds(wid, 1)],
                                  o_ref.at[pl.ds(i, 1)],
                                  sem.at[0]).start()

    # 2) While the gathers are in flight, compute the position embeddings with
    #    a one-hot matmul against the VMEM-resident position table (MXU idle).
    num_pos = pos_ref.shape[0]
    pid_col = pids_ref[...]                                            # (tile, 1) i32
    onehot = (pid_col == lax.broadcasted_iota(jnp.int32, (tile, num_pos), 1))
    pos_emb = jnp.dot(onehot.astype(pos_ref.dtype), pos_ref[...],
                      preferred_element_type=jnp.float32)              # (tile, H) f32

    # 3) ONE aggregate wait for all `tile` row copies: DMA semaphores count
    #    bytes, so a descriptor sized to the whole (tile, H) block consumes
    #    exactly the `tile` (1, H) copies issued above.
    pltpu.make_async_copy(o_ref, o_ref, sem.at[0]).wait()

    # 4) Add and store (sublane/lane-dense (tile, H) unmasked store).
    o_ref[...] = (o_ref[...].astype(jnp.float32) + pos_emb).astype(o_ref.dtype)


def gpt_embedding_1d(input_ids, position_ids, word_weight, pos_weight,
                     *, tile=None, unroll=8):
    """Forward of GPTEmbedding1D (num_tokentypes=0 => no tokentype term).

    input_ids:    [B, S] int
    position_ids: [B, S] int or None (None -> arange(S) broadcast, as in the module)
    word_weight:  [vocab_size, H]
    pos_weight:   [max_position_embeddings, H]
    returns:      [B, S, H] (dtype of word_weight)
    """
    B, S = input_ids.shape
    V, H = word_weight.shape
    P, H2 = pos_weight.shape
    assert H == H2, "word/position embedding dims must match"
    N = B * S
    out_dtype = word_weight.dtype
    itemsize = jnp.dtype(out_dtype).itemsize

    if position_ids is None:
        position_ids = jnp.broadcast_to(
            jnp.arange(S, dtype=jnp.int32)[None, :], (B, S))

    # Sublane multiple for the output block (f32: 8, bf16: 16, int8/fp8: 32).
    sub = 8 * max(1, 4 // itemsize)
    unroll = max(1, math.gcd(int(unroll) if unroll else 8, sub))

    # Per-generation VMEM budget (v5e/v6e: 128 MiB physical, v7x: 64 MiB).
    try:
        vmem_cap = int(pltpu.get_tpu_info().vmem_capacity_bytes)
    except Exception:
        vmem_cap = 64 << 20                       # conservative (v7x-sized)
    budget = int(vmem_cap * 0.6)

    fixed = 2 * P * H * itemsize                  # resident pos table (x2 pipeline bufs)
    per_row = (2 * H * itemsize                   # double-buffered output block
               + H * 4                            # f32 position contribution
               + P * 4                            # one-hot operand
               + 2 * 4)                           # position-id block
    if tile is None:
        tile = max(sub, min((budget - fixed) // max(per_row, 1), 1024))
    tile = max(sub, (int(tile) // sub) * sub)     # sublane-dense, multiple of `unroll`
    tile = min(tile, _round_up(N, sub))           # don't tile past the token count

    num_tiles = -(-N // tile)
    n_pad = num_tiles * tile

    # Flatten + clamp ids (guards the gather DMAs; PyTorch would raise on OOB ids).
    ids = jnp.clip(input_ids.reshape(-1).astype(jnp.int32), 0, V - 1)
    pids = jnp.clip(position_ids.reshape(-1).astype(jnp.int32), 0, P - 1)
    if n_pad != N:                                # pad only the tiny id vectors;
        ids = jnp.pad(ids, (0, n_pad - N))        # the (N, H) output is NOT padded.
        pids = jnp.pad(pids, (0, n_pad - N))
    pids2d = pids.reshape(n_pad, 1)

    # NOTE: full flat `ids` go to SMEM via scalar prefetch (fine for moderate N);
    # for very long contexts switch to per-tile SMEM blocks.
    grid_spec = pltpu.PrefetchScalarGridSpec(
        num_scalar_prefetch=1,
        grid=(num_tiles,),
        in_specs=[
            pl.BlockSpec((tile, 1), lambda t, _ids: (t, 0)),    # position ids (VMEM)
            pl.BlockSpec((P, H), lambda t, _ids: (0, 0)),       # pos table, VMEM-resident
            pl.BlockSpec(memory_space=pl.ANY),                  # word table stays in HBM
        ],
        out_specs=pl.BlockSpec((tile, H), lambda t, _ids: (t, 0)),
        scratch_shapes=[pltpu.SemaphoreType.DMA((1,))],
    )

    needed = fixed + tile * per_row + (4 << 20)
    vmem_limit = int(min(max(needed, 32 << 20), int(vmem_cap * 0.85)))

    out = pl.pallas_call(
        functools.partial(_embed_kernel, tile=tile, unroll=unroll),
        out_shape=jax.ShapeDtypeStruct((N, H), out_dtype),
        grid_spec=grid_spec,
        compiler_params=pltpu.CompilerParams(
            dimension_semantics=("parallel",),
            vmem_limit_bytes=vmem_limit),
        cost_estimate=pl.CostEstimate(
            flops=2 * N * P * H + N * H,
            transcendentals=0,
            bytes_accessed=(2 * N * H + P * H) * itemsize + 2 * N * 4),
    )(ids, pids2d, pos_weight, word_weight)

    return out.reshape(B, S, H)


if __name__ == "__main__":
    # Small shapes consistent with the module's forward.
    B, S = 2, 8
    H = 128                      # embedding_dim
    vocab_size = 64
    max_position_embeddings = 16
    padding_idx = 0

    key = jax.random.PRNGKey(0)
    k_ids, k_word, k_pos = jax.random.split(key, 3)

    # Deterministic params (nn.Embedding: normal init, padding_idx row zeroed).
    word_weight = jax.random.normal(k_word, (vocab_size, H), dtype=jnp.float32)
    word_weight = word_weight.at[padding_idx].set(0.0)
    pos_weight = jax.random.normal(k_pos, (max_position_embeddings, H),
                                   dtype=jnp.float32)

    input_ids = jax.random.randint(k_ids, (B, S), 0, vocab_size, dtype=jnp.int32)
    # position_ids=None in the reference forward -> arange(seq_length)[None, :].
    out = gpt_embedding_1d(input_ids, None, word_weight, pos_weight)
    out = jax.block_until_ready(out)

    # Reference check in plain JAX.
    pos_ids_ref = jnp.broadcast_to(jnp.arange(S)[None, :], (B, S))
    ref = word_weight[input_ids] + pos_weight[pos_ids_ref]
    assert out.shape == (B, S, H)
    assert jnp.allclose(out, ref, atol=1e-5, rtol=1e-5)

    print("KERNEL_OK")
</pallas_src>

<mosaic_0001>
module attributes {stable_mosaic.version = 11 : i64} {
  func.func @_embed_kernel(%arg0: i32, %arg1: memref<16xi32, #tpu.memory_space<smem>>, %arg2: memref<16x1xi32, #tpu.memory_space<vmem>>, %arg3: memref<16x128xf32, #tpu.memory_space<vmem>>, %arg4: memref<64x128xf32, #tpu.memory_space<any>>, %arg5: memref<16x128xf32, #tpu.memory_space<vmem>>, %arg6: memref<1x!tpu.dma_semaphore, #tpu.memory_space<semaphore_mem>>) attributes {dimension_semantics = [#tpu.dimension_semantics<parallel>], iteration_bounds = array<i64: 1>, scalar_prefetch = 1 : i64, scratch_operands = 1 : i64, tpu.core_type = #tpu.core_type<tc>, window_params = [{transform_indices = @transform_0, window_bounds = array<i64: 16, 1>}, {pipeline_mode = #tpu.pipeline_mode<synchronous>, transform_indices = @transform_1, window_bounds = array<i64: 16, 128>}, {}, {transform_indices = @transform_3, window_bounds = array<i64: 16, 128>}]} {
    %c16_i32 = arith.constant 16 : i32
    %0 = arith.muli %arg0, %c16_i32 : i32
    %1 = tpu.assume_multiple %0, 16 : i32
    %c0_i32 = arith.constant 0 : i32
    %c2_i32 = arith.constant 2 : i32
    %2 = arith.addi %c0_i32, %c2_i32 : i32
    %c1_i32 = arith.constant 1 : i32
    scf.for %arg7 = %c0_i32 to %2 step %c1_i32  : i32 {
      %c1_i32_9 = arith.constant 1 : i32
      %16 = arith.muli %arg7, %c1_i32_9 : i32
      %c0_i32_10 = arith.constant 0 : i32
      %17 = arith.addi %c0_i32_10, %16 : i32
      %c8_i32 = arith.constant 8 : i32
      %18 = arith.muli %17, %c8_i32 : i32
      %19 = tpu.assume_multiple %18, 8 : i32
      %c0_i32_11 = arith.constant 0 : i32
      %20 = arith.addi %19, %c0_i32_11 : i32
      %21 = arith.addi %1, %20 : i32
      %22 = arith.index_cast %21 : i32 to index
      %23 = memref.load %arg1[%22] : memref<16xi32, #tpu.memory_space<smem>>
      %c0_i32_12 = arith.constant 0 : i32
      %c0_i32_13 = arith.constant 0 : i32
      %24 = tpu.memref_slice %arg4[%23, %c0_i32_13] : memref<64x128xf32, #tpu.memory_space<any>> -> memref<1x128xf32, #tpu.memory_space<any>>
      %c0_i32_14 = arith.constant 0 : i32
      %25 = tpu.memref_slice %arg5[%20, %c0_i32_14] : memref<16x128xf32, #tpu.memory_space<vmem>> -> memref<1x128xf32, #tpu.memory_space<vmem>>
      %26 = tpu.memref_slice %arg6[%c0_i32_12] : memref<1x!tpu.dma_semaphore, #tpu.memory_space<semaphore_mem>> -> memref<1x!tpu.dma_semaphore, #tpu.memory_space<semaphore_mem>>
      %27 = tpu.memref_squeeze %26 : memref<1x!tpu.dma_semaphore, #tpu.memory_space<semaphore_mem>> -> memref<!tpu.dma_semaphore, #tpu.memory_space<semaphore_mem>>
      tpu.enqueue_dma source(%24 : memref<1x128xf32, #tpu.memory_space<any>>) target(%25 : memref<1x128xf32, #tpu.memory_space<vmem>>) target_semaphore(%27 : memref<!tpu.dma_semaphore, #tpu.memory_space<semaphore_mem>>)
      %c1_i32_15 = arith.constant 1 : i32
      %28 = arith.addi %19, %c1_i32_15 : i32
      %29 = arith.addi %1, %28 : i32
      %30 = arith.index_cast %29 : i32 to index
      %31 = memref.load %arg1[%30] : memref<16xi32, #tpu.memory_space<smem>>
      %c0_i32_16 = arith.constant 0 : i32
      %c0_i32_17 = arith.constant 0 : i32
      %32 = tpu.memref_slice %arg4[%31, %c0_i32_17] : memref<64x128xf32, #tpu.memory_space<any>> -> memref<1x128xf32, #tpu.memory_space<any>>
      %c0_i32_18 = arith.constant 0 : i32
      %33 = tpu.memref_slice %arg5[%28, %c0_i32_18] : memref<16x128xf32, #tpu.memory_space<vmem>> -> memref<1x128xf32, #tpu.memory_space<vmem>>
      %34 = tpu.memref_slice %arg6[%c0_i32_16] : memref<1x!tpu.dma_semaphore, #tpu.memory_space<semaphore_mem>> -> memref<1x!tpu.dma_semaphore, #tpu.memory_space<semaphore_mem>>
      %35 = tpu.memref_squeeze %34 : memref<1x!tpu.dma_semaphore, #tpu.memory_space<semaphore_mem>> -> memref<!tpu.dma_semaphore, #tpu.memory_space<semaphore_mem>>
      tpu.enqueue_dma source(%32 : memref<1x128xf32, #tpu.memory_space<any>>) target(%33 : memref<1x128xf32, #tpu.memory_space<vmem>>) target_semaphore(%35 : memref<!tpu.dma_semaphore, #tpu.memory_space<semaphore_mem>>)
      %c2_i32_19 = arith.constant 2 : i32
      %36 = arith.addi %19, %c2_i32_19 : i32
      %37 = arith.addi %1, %36 : i32
      %38 = arith.index_cast %37 : i32 to index
      %39 = memref.load %arg1[%38] : memref<16xi32, #tpu.memory_space<smem>>
      %c0_i32_20 = arith.constant 0 : i32
      %c0_i32_21 = arith.constant 0 : i32
      %40 = tpu.memref_slice %arg4[%39, %c0_i32_21] : memref<64x128xf32, #tpu.memory_space<any>> -> memref<1x128xf32, #tpu.memory_space<any>>
      %c0_i32_22 = arith.constant 0 : i32
      %41 = tpu.memref_slice %arg5[%36, %c0_i32_22] : memref<16x128xf32, #tpu.memory_space<vmem>> -> memref<1x128xf32, #tpu.memory_space<vmem>>
      %42 = tpu.memref_slice %arg6[%c0_i32_20] : memref<1x!tpu.dma_semaphore, #tpu.memory_space<semaphore_mem>> -> memref<1x!tpu.dma_semaphore, #tpu.memory_space<semaphore_mem>>
      %43 = tpu.memref_squeeze %42 : memref<1x!tpu.dma_semaphore, #tpu.memory_space<semaphore_mem>> -> memref<!tpu.dma_semaphore, #tpu.memory_space<semaphore_mem>>
      tpu.enqueue_dma source(%40 : memref<1x128xf32, #tpu.memory_space<any>>) target(%41 : memref<1x128xf32, #tpu.memory_space<vmem>>) target_semaphore(%43 : memref<!tpu.dma_semaphore, #tpu.memory_space<semaphore_mem>>)
      %c3_i32 = arith.constant 3 : i32
      %44 = arith.addi %19, %c3_i32 : i32
      %45 = arith.addi %1, %44 : i32
      %46 = arith.index_cast %45 : i32 to index
      %47 = memref.load %arg1[%46] : memref<16xi32, #tpu.memory_space<smem>>
      %c0_i32_23 = arith.constant 0 : i32
      %c0_i32_24 = arith.constant 0 : i32
      %48 = tpu.memref_slice %arg4[%47, %c0_i32_24] : memref<64x128xf32, #tpu.memory_space<any>> -> memref<1x128xf32, #tpu.memory_space<any>>
      %c0_i32_25 = arith.constant 0 : i32
      %49 = tpu.memref_slice %arg5[%44, %c0_i32_25] : memref<16x128xf32, #tpu.memory_space<vmem>> -> memref<1x128xf32, #tpu.memory_space<vmem>>
      %50 = tpu.memref_slice %arg6[%c0_i32_23] : memref<1x!tpu.dma_semaphore, #tpu.memory_space<semaphore_mem>> -> memref<1x!tpu.dma_semaphore, #tpu.memory_space<semaphore_mem>>
      %51 = tpu.memref_squeeze %50 : memref<1x!tpu.dma_semaphore, #tpu.memory_space<semaphore_mem>> -> memref<!tpu.dma_semaphore, #tpu.memory_space<semaphore_mem>>
      tpu.enqueue_dma source(%48 : memref<1x128xf32, #tpu.memory_space<any>>) target(%49 : memref<1x128xf32, #tpu.memory_space<vmem>>) target_semaphore(%51 : memref<!tpu.dma_semaphore, #tpu.memory_space<semaphore_mem>>)
      %c4_i32 = arith.constant 4 : i32
      %52 = arith.addi %19, %c4_i32 : i32
      %53 = arith.addi %1, %52 : i32
      %54 = arith.index_cast %53 : i32 to index
      %55 = memref.load %arg1[%54] : memref<16xi32, #tpu.memory_space<smem>>
      %c0_i32_26 = arith.constant 0 : i32
      %c0_i32_27 = arith.constant 0 : i32
      %56 = tpu.memref_slice %arg4[%55, %c0_i32_27] : memref<64x128xf32, #tpu.memory_space<any>> -> memref<1x128xf32, #tpu.memory_space<any>>
      %c0_i32_28 = arith.constant 0 : i32
      %57 = tpu.memref_slice %arg5[%52, %c0_i32_28] : memref<16x128xf32, #tpu.memory_space<vmem>> -> memref<1x128xf32, #tpu.memory_space<vmem>>
      %58 = tpu.memref_slice %arg6[%c0_i32_26] : memref<1x!tpu.dma_semaphore, #tpu.memory_space<semaphore_mem>> -> memref<1x!tpu.dma_semaphore, #tpu.memory_space<semaphore_mem>>
      %59 = tpu.memref_squeeze %58 : memref<1x!tpu.dma_semaphore, #tpu.memory_space<semaphore_mem>> -> memref<!tpu.dma_semaphore, #tpu.memory_space<semaphore_mem>>
      tpu.enqueue_dma source(%56 : memref<1x128xf32, #tpu.memory_space<any>>) target(%57 : memref<1x128xf32, #tpu.memory_space<vmem>>) target_semaphore(%59 : memref<!tpu.dma_semaphore, #tpu.memory_space<semaphore_mem>>)
      %c5_i32 = arith.constant 5 : i32
      %60 = arith.addi %19, %c5_i32 : i32
      %61 = arith.addi %1, %60 : i32
      %62 = arith.index_cast %61 : i32 to index
      %63 = memref.load %arg1[%62] : memref<16xi32, #tpu.memory_space<smem>>
      %c0_i32_29 = arith.constant 0 : i32
      %c0_i32_30 = arith.constant 0 : i32
      %64 = tpu.memref_slice %arg4[%63, %c0_i32_30] : memref<64x128xf32, #tpu.memory_space<any>> -> memref<1x128xf32, #tpu.memory_space<any>>
      %c0_i32_31 = arith.constant 0 : i32
      %65 = tpu.memref_slice %arg5[%60, %c0_i32_31] : memref<16x128xf32, #tpu.memory_space<vmem>> -> memref<1x128xf32, #tpu.memory_space<vmem>>
      %66 = tpu.memref_slice %arg6[%c0_i32_29] : memref<1x!tpu.dma_semaphore, #tpu.memory_space<semaphore_mem>> -> memref<1x!tpu.dma_semaphore, #tpu.memory_space<semaphore_mem>>
      %67 = tpu.memref_squeeze %66 : memref<1x!tpu.dma_semaphore, #tpu.memory_space<semaphore_mem>> -> memref<!tpu.dma_semaphore, #tpu.memory_space<semaphore_mem>>
      tpu.enqueue_dma source(%64 : memref<1x128xf32, #tpu.memory_space<any>>) target(%65 : memref<1x128xf32, #tpu.memory_space<vmem>>) target_semaphore(%67 : memref<!tpu.dma_semaphore, #tpu.memory_space<semaphore_mem>>)
      %c6_i32 = arith.constant 6 : i32
      %68 = arith.addi %19, %c6_i32 : i32
      %69 = arith.addi %1, %68 : i32
      %70 = arith.index_cast %69 : i32 to index
      %71 = memref.load %arg1[%70] : memref<16xi32, #tpu.memory_space<smem>>
      %c0_i32_32 = arith.constant 0 : i32
      %c0_i32_33 = arith.constant 0 : i32
      %72 = tpu.memref_slice %arg4[%71, %c0_i32_33] : memref<64x128xf32, #tpu.memory_space<any>> -> memref<1x128xf32, #tpu.memory_space<any>>
      %c0_i32_34 = arith.constant 0 : i32
      %73 = tpu.memref_slice %arg5[%68, %c0_i32_34] : memref<16x128xf32, #tpu.memory_space<vmem>> -> memref<1x128xf32, #tpu.memory_space<vmem>>
      %74 = tpu.memref_slice %arg6[%c0_i32_32] : memref<1x!tpu.dma_semaphore, #tpu.memory_space<semaphore_mem>> -> memref<1x!tpu.dma_semaphore, #tpu.memory_space<semaphore_mem>>
      %75 = tpu.memref_squeeze %74 : memref<1x!tpu.dma_semaphore, #tpu.memory_space<semaphore_mem>> -> memref<!tpu.dma_semaphore, #tpu.memory_space<semaphore_mem>>
      tpu.enqueue_dma source(%72 : memref<1x128xf32, #tpu.memory_space<any>>) target(%73 : memref<1x128xf32, #tpu.memory_space<vmem>>) target_semaphore(%75 : memref<!tpu.dma_semaphore, #tpu.memory_space<semaphore_mem>>)
      %c7_i32 = arith.constant 7 : i32
      %76 = arith.addi %19, %c7_i32 : i32
      %77 = arith.addi %1, %76 : i32
      %78 = arith.index_cast %77 : i32 to index
      %79 = memref.load %arg1[%78] : memref<16xi32, #tpu.memory_space<smem>>
      %c0_i32_35 = arith.constant 0 : i32
      %c0_i32_36 = arith.constant 0 : i32
      %80 = tpu.memref_slice %arg4[%79, %c0_i32_36] : memref<64x128xf32, #tpu.memory_space<any>> -> memref<1x128xf32, #tpu.memory_space<any>>
      %c0_i32_37 = arith.constant 0 : i32
      %81 = tpu.memref_slice %arg5[%76, %c0_i32_37] : memref<16x128xf32, #tpu.memory_space<vmem>> -> memref<1x128xf32, #tpu.memory_space<vmem>>
      %82 = tpu.memref_slice %arg6[%c0_i32_35] : memref<1x!tpu.dma_semaphore, #tpu.memory_space<semaphore_mem>> -> memref<1x!tpu.dma_semaphore, #tpu.memory_space<semaphore_mem>>
      %83 = tpu.memref_squeeze %82 : memref<1x!tpu.dma_semaphore, #tpu.memory_space<semaphore_mem>> -> memref<!tpu.dma_semaphore, #tpu.memory_space<semaphore_mem>>
      tpu.enqueue_dma source(%80 : memref<1x128xf32, #tpu.memory_space<any>>) target(%81 : memref<1x128xf32, #tpu.memory_space<vmem>>) target_semaphore(%83 : memref<!tpu.dma_semaphore, #tpu.memory_space<semaphore_mem>>)
    }
    %c2_i32_0 = arith.constant 2 : i32
    %c0 = arith.constant 0 : index
    %c0_1 = arith.constant 0 : index
    %3 = vector.load %arg2[%c0, %c0_1] : memref<16x1xi32, #tpu.memory_space<vmem>>, vector<16x1xi32>
    %4 = tpu.iota {dimensions = array<i32: 1>} : vector<16x16xi32>
    %5 = vector.broadcast %3 : vector<16x1xi32> to vector<16x16xi32>
    %6 = arith.cmpi eq, %5, %4 : vector<16x16xi32>
    %7 = arith.extui %6 : vector<16x16xi1> to vector<16x16xi32>
    %8 = arith.sitofp %7 : vector<16x16xi32> to vector<16x16xf32>
    %c0_2 = arith.constant 0 : index
    %c0_3 = arith.constant 0 : index
    %9 = vector.load %arg3[%c0_2, %c0_3] : memref<16x128xf32, #tpu.memory_space<vmem>>, vector<16x128xf32>
    %cst = arith.constant dense<0.000000e+00> : vector<16x128xf32>
    %10 = tpu.matmul %8, %9, %cst {dimension_numbers = #tpu.dot_dimension_numbers<[1], [0], [0], [1], [0, 0, 1, 1], [], []>} : vector<16x16xf32>, vector<16x128xf32>, vector<16x128xf32> -> vector<16x128xf32>
    %c0_i32_4 = arith.constant 0 : i32
    %11 = tpu.memref_slice %arg6[%c0_i32_4] : memref<1x!tpu.dma_semaphore, #tpu.memory_space<semaphore_mem>> -> memref<1x!tpu.dma_semaphore, #tpu.memory_space<semaphore_mem>>
    %12 = tpu.memref_squeeze %11 : memref<1x!tpu.dma_semaphore, #tpu.memory_space<semaphore_mem>> -> memref<!tpu.dma_semaphore, #tpu.memory_space<semaphore_mem>>
    tpu.wait_dma2 semaphore(%12 : memref<!tpu.dma_semaphore, #tpu.memory_space<semaphore_mem>>) src(%arg5 : memref<16x128xf32, #tpu.memory_space<vmem>>) dst(%arg5 : memref<16x128xf32, #tpu.memory_space<vmem>>)
    %c0_5 = arith.constant 0 : index
    %c0_6 = arith.constant 0 : index
    %13 = vector.load %arg5[%c0_5, %c0_6] : memref<16x128xf32, #tpu.memory_space<vmem>>, vector<16x128xf32>
    %14 = arith.addf %13, %10 : vector<16x128xf32>
    %c0_7 = arith.constant 0 : index
    %c0_8 = arith.constant 0 : index
    %15 = vector.load %arg5[%c0_7, %c0_8] : memref<16x128xf32, #tpu.memory_space<vmem>>, vector<16x128xf32>
    tpu.vector_store %arg5[%c0_7, %c0_8], %14 {strides = array<i32>} : memref<16x128xf32, #tpu.memory_space<vmem>>, vector<16x128xf32>,
    return
  }
  func.func @transform_0(%arg0: i32, %arg1: memref<16xi32, #tpu.memory_space<smem>>) -> (i32, i32) {
    %c0_i32 = arith.constant 0 : i32
    %c0_i32_0 = arith.constant 0 : i32
    return %arg0, %c0_i32 : i32, i32
  }
  func.func @transform_1(%arg0: i32, %arg1: memref<16xi32, #tpu.memory_space<smem>>) -> (i32, i32) {
    %c0_i32 = arith.constant 0 : i32
    %c0_i32_0 = arith.constant 0 : i32
    %c0_i32_1 = arith.constant 0 : i32
    return %c0_i32, %c0_i32_0 : i32, i32
  }
  func.func @transform_3(%arg0: i32, %arg1: memref<16xi32, #tpu.memory_space<smem>>) -> (i32, i32) {
    %c0_i32 = arith.constant 0 : i32
    %c0_i32_0 = arith.constant 0 : i32
    return %arg0, %c0_i32 : i32, i32
  }
}

</mosaic_0001>

<llo_original>
// kernel: tpu_custom_call.1
$region0: #{tpu_custom_call.1}
  #allocation0 [shape = 'u32[]', space=smem, size = 0x4, offset = 0x4, fixed_abs, tag = 'smem constant byte address 0x4 - core index']
  #allocation1 [shape = 'u32[72,128]{1,0:T(1,128)}', space=vmem, size = 0x9000, scoped, tag = 'internal scratch']
  #allocation2 [shape = 's32[1]{0}', space=sflag, size = 0x4, scoped, tag = 'scratch operand']
  #allocation3 [shape = 's32[1]{0}', space=sflag, size = 0x4, scoped, tag = 'scoped memory for tpu_custom_call.1']
  #allocation4 [shape = 'u8[512]{0}', space=smem, size = 0x200, scoped, tag = 'prefetched SMEM operand 0']
  #allocation7 [shape = 's32[]', space=sflag, size = 0x4, offset = 0, fixed_abs, tag = 'sflag constant byte address 0x0 - dummy sync flag']
  #allocation8 [shape = 's32[]', space=sflag, size = 0x4, offset = 0, fixed_abs, tag = 'sflag constant byte address 0x0 - dummy sync flag']
  #allocation9 [shape = 'u32[]', space=smem, size = 0x4, offset = 0x44, fixed_abs, tag = 'smem constant byte address 0x44 - assertion arg 0']
  #allocation10 [shape = 'u32[]', space=smem, size = 0x4, offset = 0x48, fixed_abs, tag = 'smem constant byte address 0x48 - assertion arg 1']
  #allocation11 [shape = 's32[]', space=sflag, size = 0x4, offset = 0, fixed_abs, tag = 'sflag constant byte address 0x0 - dummy sync flag']
  #allocation12 [shape = 's32[]', space=sflag, size = 0x4, offset = 0, fixed_abs, tag = 'sflag constant byte address 0x0 - dummy sync flag']
  #allocation13 [shape = 's32[]', space=sflag, size = 0x4, offset = 0, fixed_abs, tag = 'sflag constant byte address 0x0 - dummy sync flag']
  #allocation14 [shape = 's32[]', space=sflag, size = 0x4, offset = 0, fixed_abs, tag = 'sflag constant byte address 0x0 - dummy sync flag']
  #allocation15 [shape = 's32[]', space=sflag, size = 0x4, offset = 0, fixed_abs, tag = 'sflag constant byte address 0x0 - dummy sync flag']
  #allocation16 [shape = 's32[]', space=sflag, size = 0x4, offset = 0, fixed_abs, tag = 'sflag constant byte address 0x0 - dummy sync flag']
  #allocation17 [shape = 's32[]', space=sflag, size = 0x4, offset = 0, fixed_abs, tag = 'sflag constant byte address 0x0 - dummy sync flag']
  #allocation18 [shape = 's32[]', space=sflag, size = 0x4, offset = 0, fixed_abs, tag = 'sflag constant byte address 0x0 - dummy sync flag']
  #allocation19 [shape = 's32[]', space=sflag, size = 0x4, offset = 0, fixed_abs, tag = 'sflag constant byte address 0x0 - dummy sync flag']
  #allocation20 [shape = 's32[]', space=sflag, size = 0x4, offset = 0, fixed_abs, tag = 'sflag constant byte address 0x0 - dummy sync flag']
  #allocation21 [shape = 's32[]', space=sflag, size = 0x4, offset = 0, fixed_abs, tag = 'sflag constant byte address 0x0 - dummy sync flag']
  #allocation22 [shape = 's32[]', space=sflag, size = 0x4, offset = 0, fixed_abs, tag = 'sflag constant byte address 0x0 - dummy sync flag']
  #allocation23 [shape = 's32[]', space=sflag, size = 0x4, offset = 0, fixed_abs, tag = 'sflag constant byte address 0x0 - dummy sync flag']
  #allocation24 [shape = 's32[]', space=sflag, size = 0x4, offset = 0, fixed_abs, tag = 'sflag constant byte address 0x0 - dummy sync flag']
  %s0 = inlined_call_operand.vmem [shape: s32[16], index: 0, kind: input, shape index: {}]
  %s1 = inlined_call_operand.vmem [shape: s32[16,1], index: 1, kind: input, shape index: {}]
  %s2 = inlined_call_operand.vmem [shape: f32[16,128], index: 2, kind: input, shape index: {}]
  %s3 = inlined_call_operand.hbm [shape: f32[64,128], index: 3, kind: input, shape index: {}]
  %s4 = inlined_call_operand.hbm [shape: f32[16,128], index: 4, kind: output, shape index: {}]
  %s5 = sld [smem:[#allocation0]]
  $region57: #{tpu_custom_call.1} parent=0
    _
  %s7 = ssub.s32 1, %s5
  %s8 = scalar_select 0, %s7, %s5
  %s10 = sshll.u32 %s0, 4
  %s11 = int_to_ptr.vmem [resolvable:$true] %s10
  %13 = dma.vmem_to_smem %s11, 16, [#allocation4], [#allocation3]
  %15 = dma.done [#allocation3], 16
  %16 = sfence
  $region1: #{tpu_custom_call.1} parent=0
    #allocation5 [shape = 'u8[8192]{0}', space=vmem, size = 0x2000, scoped, tag = 'output window, operand 0, single buffered']
    #allocation6 [shape = 's32[1]{0}', space=sflag, size = 0x4, scoped, tag = 'scoped memory for tpu_custom_call.1']
    %17 = vsyncpa [#allocation6], 0
    // Predicated region
    $region2: #{tpu_custom_call.1} parent=1 // pred_check
      _
    $region3: #{tpu_custom_call.1} parent=1 // pred_check_branch
      %19 = sbr.rel (0) target = $region5
    $region4: #{tpu_custom_call.1} parent=1 // pred_region
      _
    $region5: #{tpu_custom_call.1} parent=1 // pred_fallthru
      _
    // Predicated region
    $region6: #{tpu_custom_call.1} parent=1 // pred_check
      _
    $region7: #{tpu_custom_call.1} parent=1 // pred_check_branch
      %21 = sbr.rel (0) target = $region9
    $region8: #{tpu_custom_call.1} parent=1 // pred_region
      _
    $region9: #{tpu_custom_call.1} parent=1 // pred_fallthru
      _
    %s22 = smul.u32 0, 16
    loop: start=0, step=1, limit=2
    $region10: #{tpu_custom_call.1} parent=1 // loop_pre_header
      _
    $region11: #{tpu_custom_call.1} parent=1 // loop_header
      %s24 = sphi 0, %s28
      %p25 = scmp.ge.s32.totalorder %s24, 2
    $region12: #{tpu_custom_call.1} parent=1 // loop_header_branch
      %27 = sbr.rel (%p25) target = $region16
    $region13: #{tpu_custom_call.1} parent=1 // loop_body
      %s29 = smul.u32 %s24, 8
      %s30 = sadd.s32 %s22, %s29
      %s31 = sld [smem:[#allocation4 + %s30]]
      %s32 = scalar_lea.hbm %s3, %s31
      %s33 = scalar_lea.vmem [#allocation5], %s29
      // Predicated region
      $region17: #{tpu_custom_call.1} parent=13 // pred_check
        _
      $region18: #{tpu_custom_call.1} parent=13 // pred_check_branch
        %35 = sbr.rel target = $region20
      $region19: #{tpu_custom_call.1} parent=13 // pred_region
        %36 = sst [smem:[#allocation9]] [#allocation8]
        %37 = sst [smem:[#allocation10]] [#allocation7]
      $region20: #{tpu_custom_call.1} parent=13 // pred_fallthru
        _
      %39 = shalt.err (0)
      %s41 = sshll.u32 %s32, 4
      %s42 = int_to_ptr.hbm [resolvable:$true] %s41
      %s43 = sshll.u32 %s33, 4
      %s44 = int_to_ptr.vmem [resolvable:$true] %s43
      %46 = dma.hbm_to_vmem [thread:$0]  %s42, 16, %s44, [#allocation2]
      %s47 = sadd.s32 %s29, 1
      %s48 = sadd.s32 %s22, %s47
      %s49 = sld [smem:[#allocation4 + %s48]]
      %s50 = scalar_lea.hbm %s3, %s49
      %s51 = scalar_lea.vmem [#allocation5], %s47
      // Predicated region
      $region21: #{tpu_custom_call.1} parent=13 // pred_check
        _
      $region22: #{tpu_custom_call.1} parent=13 // pred_check_branch
        %53 = sbr.rel target = $region24
      $region23: #{tpu_custom_call.1} parent=13 // pred_region
        %54 = sst [smem:[#allocation9]] [#allocation12]
        %55 = sst [smem:[#allocation10]] [#allocation11]
      $region24: #{tpu_custom_call.1} parent=13 // pred_fallthru
        _
      %57 = shalt.err (0)
      %s59 = sshll.u32 %s50, 4
      %s60 = int_to_ptr.hbm [resolvable:$true] %s59
      %s61 = sshll.u32 %s51, 4
      %s62 = int_to_ptr.vmem [resolvable:$true] %s61
      %64 = dma.hbm_to_vmem [thread:$0]  %s60, 16, %s62, [#allocation2]
      %s65 = sadd.s32 %s29, 2
      %s66 = sadd.s32 %s22, %s65
      %s67 = sld [smem:[#allocation4 + %s66]]
      %s68 = scalar_lea.hbm %s3, %s67
      %s69 = scalar_lea.vmem [#allocation5], %s65
      // Predicated region
      $region25: #{tpu_custom_call.1} parent=13 // pred_check
        _
      $region26: #{tpu_custom_call.1} parent=13 // pred_check_branch
        %71 = sbr.rel target = $region28
      $region27: #{tpu_custom_call.1} parent=13 // pred_region
        %72 = sst [smem:[#allocation9]] [#allocation14]
        %73 = sst [smem:[#allocation10]] [#allocation13]
      $region28: #{tpu_custom_call.1} parent=13 // pred_fallthru
        _
      %75 = shalt.err (0)
      %s77 = sshll.u32 %s68, 4
      %s78 = int_to_ptr.hbm [resolvable:$true] %s77
      %s79 = sshll.u32 %s69, 4
      %s80 = int_to_ptr.vmem [resolvable:$true] %s79
      %82 = dma.hbm_to_vmem [thread:$0]  %s78, 16, %s80, [#allocation2]
      %s83 = sadd.s32 %s29, 3
      %s84 = sadd.s32 %s22, %s83
      %s85 = sld [smem:[#allocation4 + %s84]]
      %s86 = scalar_lea.hbm %s3, %s85
      %s87 = scalar_lea.vmem [#allocation5], %s83
      // Predicated region
      $region29: #{tpu_custom_call.1} parent=13 // pred_check
        _
      $region30: #{tpu_custom_call.1} parent=13 // pred_check_branch
        %89 = sbr.rel target = $region32
      $region31: #{tpu_custom_call.1} parent=13 // pred_region
        %90 = sst [smem:[#allocation9]] [#allocation16]
        %91 = sst [smem:[#allocation10]] [#allocation15]
      $region32: #{tpu_custom_call.1} parent=13 // pred_fallthru
        _
      %93 = shalt.err (0)
      %s95 = sshll.u32 %s86, 4
      %s96 = int_to_ptr.hbm [resolvable:$true] %s95
      %s97 = sshll.u32 %s87, 4
      %s98 = int_to_ptr.vmem [resolvable:$true] %s97
      %100 = dma.hbm_to_vmem [thread:$0]  %s96, 16, %s98, [#allocation2]
      %s101 = sadd.s32 %s29, 4
      %s102 = sadd.s32 %s22, %s101
      %s103 = sld [smem:[#allocation4 + %s102]]
      %s104 = scalar_lea.hbm %s3, %s103
      %s105 = scalar_lea.vmem [#allocation5], %s101
      // Predicated region
      $region33: #{tpu_custom_call.1} parent=13 // pred_check
        _
      $region34: #{tpu_custom_call.1} parent=13 // pred_check_branch
        %107 = sbr.rel target = $region36
      $region35: #{tpu_custom_call.1} parent=13 // pred_region
        %108 = sst [smem:[#allocation9]] [#allocation18]
        %109 = sst [smem:[#allocation10]] [#allocation17]
      $region36: #{tpu_custom_call.1} parent=13 // pred_fallthru
        _
      %111 = shalt.err (0)
      %s113 = sshll.u32 %s104, 4
      %s114 = int_to_ptr.hbm [resolvable:$true] %s113
      %s115 = sshll.u32 %s105, 4
      %s116 = int_to_ptr.vmem [resolvable:$true] %s115
      %118 = dma.hbm_to_vmem [thread:$0]  %s114, 16, %s116, [#allocation2]
      %s119 = sadd.s32 %s29, 5
      %s120 = sadd.s32 %s22, %s119
      %s121 = sld [smem:[#allocation4 + %s120]]
      %s122 = scalar_lea.hbm %s3, %s121
      %s123 = scalar_lea.vmem [#allocation5], %s119
      // Predicated region
      $region37: #{tpu_custom_call.1} parent=13 // pred_check
        _
      $region38: #{tpu_custom_call.1} parent=13 // pred_check_branch
        %125 = sbr.rel target = $region40
      $region39: #{tpu_custom_call.1} parent=13 // pred_region
        %126 = sst [smem:[#allocation9]] [#allocation20]
        %127 = sst [smem:[#allocation10]] [#allocation19]
      $region40: #{tpu_custom_call.1} parent=13 // pred_fallthru
        _
      %129 = shalt.err (0)
      %s131 = sshll.u32 %s122, 4
      %s132 = int_to_ptr.hbm [resolvable:$true] %s131
      %s133 = sshll.u32 %s123, 4
      %s134 = int_to_ptr.vmem [resolvable:$true] %s133
      %136 = dma.hbm_to_vmem [thread:$0]  %s132, 16, %s134, [#allocation2]
      %s137 = sadd.s32 %s29, 6
      %s138 = sadd.s32 %s22, %s137
      %s139 = sld [smem:[#allocation4 + %s138]]
      %s140 = scalar_lea.hbm %s3, %s139
      %s141 = scalar_lea.vmem [#allocation5], %s137
      // Predicated region
      $region41: #{tpu_custom_call.1} parent=13 // pred_check
        _
      $region42: #{tpu_custom_call.1} parent=13 // pred_check_branch
        %143 = sbr.rel target = $region44
      $region43: #{tpu_custom_call.1} parent=13 // pred_region
        %144 = sst [smem:[#allocation9]] [#allocation22]
        %145 = sst [smem:[#allocation10]] [#allocation21]
      $region44: #{tpu_custom_call.1} parent=13 // pred_fallthru
        _
      %147 = shalt.err (0)
      %s149 = sshll.u32 %s140, 4
      %s150 = int_to_ptr.hbm [resolvable:$true] %s149
      %s151 = sshll.u32 %s141, 4
      %s152 = int_to_ptr.vmem [resolvable:$true] %s151
      %154 = dma.hbm_to_vmem [thread:$0]  %s150, 16, %s152, [#allocation2]
      %s155 = sadd.s32 %s29, 7
      %s156 = sadd.s32 %s22, %s155
      %s157 = sld [smem:[#allocation4 + %s156]]
      %s158 = scalar_lea.hbm %s3, %s157
      %s159 = scalar_lea.vmem [#allocation5], %s155
      // Predicated region
      $region45: #{tpu_custom_call.1} parent=13 // pred_check
        _
      $region46: #{tpu_custom_call.1} parent=13 // pred_check_branch
        %161 = sbr.rel target = $region48
      $region47: #{tpu_custom_call.1} parent=13 // pred_region
        %162 = sst [smem:[#allocation9]] [#allocation24]
        %163 = sst [smem:[#allocation10]] [#allocation23]
      $region48: #{tpu_custom_call.1} parent=13 // pred_fallthru
        _
      %165 = shalt.err (0)
      %s167 = sshll.u32 %s158, 4
      %s168 = int_to_ptr.hbm [resolvable:$true] %s167
      %s169 = sshll.u32 %s159, 4
      %s170 = int_to_ptr.vmem [resolvable:$true] %s169
      %172 = dma.hbm_to_vmem [thread:$0]  %s168, 16, %s170, [#allocation2]
    $region14: #{tpu_custom_call.1} parent=1 // loop_footer
      %s28 = sadd.s32 1, %s24
    $region15: #{tpu_custom_call.1} parent=1 // loop_footer_branch
      %23 = sbr.rel target = $region11
    $region16: #{tpu_custom_call.1} parent=1 // loop_exit
      _
    %v173 = vld [vmem:[%s1] sm:$0xff]
    %v174 = vld [vmem:[%s1 + $0x8] sm:$0xff]
    %v175 = vlaneseq
    %v176 = vand.u32 %v175, 127
    %177 = vset.pattern.permute.xlu0 0
    %178 = vperm.xlu0 %177, %v173
    %v179 = vpop.permute.xlu0 %178
    %180 = vset.pattern.permute.xlu0 0
    %181 = vperm.xlu0 %180, %v174
    %v182 = vpop.permute.xlu0 %181
    %vm183 = vcmp.eq.s32.totalorder %v179, %v176
    %vm184 = vcmp.eq.s32.totalorder %v182, %v176
    %v185 = vsel %vm183, 1, 0
    %v186 = vsel %vm184, 1, 0
    %v187 = vcvt.s32.f32 %v185
    %v188 = vcvt.s32.f32 %v186
    %v189 = vld [vmem:[%s2] sm:$0xff]
    %v190 = vld [vmem:[%s2 + $0x8] sm:$0xff]
    %vm191 = vcmask 130048
    %v193 = vsel %vm191, %v187, 0
    %v196 = vsel %vm191, %v188, 0
    %198 = vmatpush.msra.mxu0 0.0
    %199 = vmatpush.msra.mxu0 0.0
    %200 = vmatpush.msra.mxu0 0.0
    %201 = vmatpush.msra.mxu0 0.0
    %202 = vmatpush.msra.mxu0 0.0
    %203 = vmatpush.msra.mxu0 0.0
    %204 = vmatpush.msra.mxu0 0.0
    %205 = vmatpush.msra.mxu0 0.0
    %206 = vmatpush.msra.mxu0 0.0
    %207 = vmatpush.msra.mxu0 0.0
    %208 = vmatpush.msra.mxu0 0.0
    %209 = vmatpush.msra.mxu0 0.0
    %210 = vmatpush.msra.mxu0 0.0
    %211 = vmatpush.msra.mxu0 0.0
    %212 = vmatpush.msra.mxu0 %v190
    %213 = vmatpush.msra.mxu0 %v189
    %214 = vmatmul.f32.gmra.mxu0 %v193
    %v215 = vpop.f32.mrf.mxu0
    %v216 = vadd.f32 0.0, %v215
    %217 = vmatmul.f32.gmra.mxu0 %v196
    %v218 = vpop.f32.mrf.mxu0
    %v219 = vadd.f32 0.0, %v218
    %220 = vdwg.mxu0
    %s221 = smul.u32 16, 1
    %s222 = sshll.u32 %s221, 4
    %223 = dma.done [#allocation2], %s222
    %v224 = vld [vmem:[#allocation5] sm:$0xff]
    %v225 = vld [vmem:[#allocation5 + $0x8] sm:$0xff]
    %v226 = vadd.f32 %v224, %v216
    %v227 = vadd.f32 %v225, %v219
    %228 = vst [vmem:[#allocation5] sm:$0xff] %v226
    %229 = vst [vmem:[#allocation5 + $0x8] sm:$0xff] %v227
    // Predicated region
    $region49: #{tpu_custom_call.1} parent=1 // pred_check
      _
    $region50: #{tpu_custom_call.1} parent=1 // pred_check_branch
      %231 = sbr.rel (0) target = $region52
    $region51: #{tpu_custom_call.1} parent=1 // pred_region
      %233 = vsyncadd [#allocation6], 0
      %s234 = sshll.u32 [#allocation5], 4
      %s235 = int_to_ptr.vmem [resolvable:$true] %s234
      %s236 = sshll.u32 %s4, 4
      %s237 = int_to_ptr.hbm [resolvable:$true] %s236
      %242 = dma.vmem_to_hbm [thread:$0]  %s235, 256, %s237, [#allocation6], 128, 128, 8
    $region52: #{tpu_custom_call.1} parent=1 // pred_fallthru
      _
    // Predicated region
    $region53: #{tpu_custom_call.1} parent=1 // pred_check
      _
    $region54: #{tpu_custom_call.1} parent=1 // pred_check_branch
      %244 = sbr.rel (0) target = $region56
    $region55: #{tpu_custom_call.1} parent=1 // pred_region
      %246 = dma.done [#allocation6], 256
    $region56: #{tpu_custom_call.1} parent=1 // pred_fallthru
      _
    %247 = vsyncpa [#allocation6], 1
  %248 = vsyncmov [#allocation2]
  %s249 = vpop.sfrf %248
  %p250 = scmp.eq.s32.totalorder %s249, 0
  %p251 = pneg %p250
  %253 = shalt.err (%p251)

</llo_original>
